<compile_context>
chip_gen: v5e
topology: v5e:2x2
jax: 0.10.0
libtpu: 0.0.40
codegen_flags: <defaults>
</compile_context>

<pallas_src>
import functools

import jax
import jax.numpy as jnp
from jax.experimental import pallas as pl
from jax.experimental.pallas import tpu as pltpu


# ----------------------------- config (synthetic) -----------------------------
N_IN = 32        # tde_merger_dim
N_LANE_ATT = 32  # lane_att_dim
N_LANE = 4       # lane
BATCH = 2
BN_EPS = 1e-5

OUT_PAD = 128            # lane-dense packed output width (att_feats | att_w | 0)
DEFAULT_BLOCK_B = 256    # batch rows per grid step (multiple of 8 sublanes)


# --------------------------------- kernel ------------------------------------
def lane_attention_kernel(feats_ref,
                          w1_ref, b1_ref,
                          w2_ref, b2_ref,
                          w3_ref, b3_ref,
                          out_ref,
                          *, n_lane, n_in):
    """One batch tile of the LaneAttention forward.

    feats_ref : (TB, L*D)  flattened lane features for this batch block
    w1/b1     : (L*D, A), (1, A)   first Linear (+ReLU)
    w2/b2     : (A, A), (1, A)     second Linear with BatchNorm folded in
    w3/b3     : (A, L), (1, L)     final Linear
    out_ref   : (TB, 128)  packed: lanes [0, D) = att_feats, [D, D+L) = att_w
    """
    feats = feats_ref[...]                                   # f32 (TB, 128)

    # Linear(L*D -> A) + ReLU
    h1 = jnp.dot(feats, w1_ref[...], preferred_element_type=jnp.float32)
    h1 = jnp.maximum(h1 + b1_ref[...], 0.0)

    # Linear(A -> A) with BN (inference) pre-folded into w2/b2
    h2 = jnp.dot(h1, w2_ref[...], preferred_element_type=jnp.float32)
    h2 = h2 + b2_ref[...]

    # Linear(A -> L)
    logits = jnp.dot(h2, w3_ref[...], preferred_element_type=jnp.float32)
    logits = logits + b3_ref[...]

    # Softmax over the lane dimension
    m = jnp.max(logits, axis=1, keepdims=True)
    e = jnp.exp(logits - m)
    w = e / jnp.sum(e, axis=1, keepdims=True)                # (TB, L)

    # att_feats[b, d] = sum_l w[b, l] * feats[b, l*D + d]
    # Static lane slices of the flat feats tile (no duplicate (B, L, D) input).
    att_f = w[:, 0:1] * feats[:, 0:n_in]
    for l in range(1, n_lane):                               # tiny static unroll (L=4)
        att_f = att_f + w[:, l:l + 1] * feats[:, l * n_in:(l + 1) * n_in]

    # Pack both results into one 128-lane-dense slab -> single unmasked store.
    pad_w = out_ref.shape[1] - (n_in + n_lane)
    zeros = jnp.zeros((feats.shape[0], pad_w), jnp.float32)
    out_ref[...] = jnp.concatenate([att_f, w, zeros], axis=1)


# -------------------------------- wrapper ------------------------------------
def _round_up(x, m):
    return ((x + m - 1) // m) * m


def lane_attention(inputs, params, *, block_b=DEFAULT_BLOCK_B):
    """inputs: (B*L, D) f32.  Returns (att_weights (B, L), att_feats (B, D))."""
    bl, d = inputs.shape
    assert d == N_IN and bl % N_LANE == 0
    b = bl // N_LANE
    ld = N_LANE * N_IN
    a = N_LANE_ATT

    feats = inputs.reshape(b, ld)

    # Fold inference-mode BatchNorm1d into the second Linear (no bias).
    scale = params["gamma"] * jax.lax.rsqrt(params["var"] + BN_EPS)   # (1, A)
    w2f = params["w2"] * scale                                        # scale out-features
    b2f = params["beta"] - params["mean"] * scale                     # (1, A)

    # Batch tiling: TB is a multiple of 8 sublanes; pad batch to a multiple of TB.
    tb = min(block_b, _round_up(b, 8))
    b_pad = _round_up(b, tb)
    if b_pad != b:
        feats = jnp.pad(feats, ((0, b_pad - b), (0, 0)))
    grid = (b_pad // tb,)

    # Advisory cost: ~2*(LD*A + A*A + A*L) flops/row, exp per lane, f32 traffic.
    weight_bytes = 4 * (ld * a + a + a * a + a + a * N_LANE + N_LANE)
    cost = pl.CostEstimate(
        flops=int(b_pad) * 2 * (ld * a + a * a + a * N_LANE),
        transcendentals=int(b_pad) * N_LANE,
        bytes_accessed=4 * (b_pad * ld + b_pad * OUT_PAD) + weight_bytes,
    )

    kernel = functools.partial(lane_attention_kernel, n_lane=N_LANE, n_in=N_IN)

    packed = pl.pallas_call(
        kernel,
        out_shape=jax.ShapeDtypeStruct((b_pad, OUT_PAD), jnp.float32),
        grid=grid,
        in_specs=[
            # Streamed activations: one batch block per grid step.
            pl.BlockSpec((tb, ld), lambda i: (i, 0)),
            # Weights: constant block index -> DMA'd once, resident across grid.
            pl.BlockSpec((ld, a), lambda i: (0, 0)),
            pl.BlockSpec((1, a), lambda i: (0, 0)),
            pl.BlockSpec((a, a), lambda i: (0, 0)),
            pl.BlockSpec((1, a), lambda i: (0, 0)),
            pl.BlockSpec((a, N_LANE), lambda i: (0, 0)),
            pl.BlockSpec((1, N_LANE), lambda i: (0, 0)),
        ],
        out_specs=pl.BlockSpec((tb, OUT_PAD), lambda i: (i, 0)),
        compiler_params=pltpu.CompilerParams(
            dimension_semantics=("parallel",)),   # megacore-shardable batch axis
        cost_estimate=cost,
    )(feats, params["w1"], params["b1"], w2f, b2f, params["w3"], params["b3"])

    packed = packed[:b]
    att_f = packed[:, :N_IN]
    att_w = packed[:, N_IN:N_IN + N_LANE]
    return att_w, att_f


# ---------------------------- pure-JAX reference ------------------------------
def lane_attention_ref(inputs, p):
    b = inputs.shape[0] // N_LANE
    feats = inputs.reshape(b, N_LANE * N_IN)
    h1 = jnp.maximum(feats @ p["w1"] + p["b1"], 0.0)
    h2 = h1 @ p["w2"]
    h2 = (h2 - p["mean"]) * (p["gamma"] / jnp.sqrt(p["var"] + BN_EPS)) + p["beta"]
    logits = h2 @ p["w3"] + p["b3"]
    w = jax.nn.softmax(logits, axis=1)
    af = (w.reshape(-1, 1) * inputs).reshape(b, N_LANE, N_IN).sum(1)
    return w, af


# ---------------------------------- main --------------------------------------
if __name__ == "__main__":
    key = jax.random.PRNGKey(0)
    keys = jax.random.split(key, 10)

    # Deterministic synthetic parameters (shapes follow the module __init__).
    params = {
        "w1": 0.05 * jax.random.normal(keys[0], (N_LANE * N_IN, N_LANE_ATT), jnp.float32),
        "b1": 0.01 * jax.random.normal(keys[1], (1, N_LANE_ATT), jnp.float32),
        "w2": 0.05 * jax.random.normal(keys[2], (N_LANE_ATT, N_LANE_ATT), jnp.float32),
        "gamma": 1.0 + 0.1 * jax.random.normal(keys[3], (1, N_LANE_ATT), jnp.float32),
        "beta": 0.05 * jax.random.normal(keys[4], (1, N_LANE_ATT), jnp.float32),
        "mean": 0.02 * jax.random.normal(keys[5], (1, N_LANE_ATT), jnp.float32),
        "var": 1.0 + 0.1 * jax.nn.softplus(jax.random.normal(keys[6], (1, N_LANE_ATT), jnp.float32)),
        "w3": 0.05 * jax.random.normal(keys[7], (N_LANE_ATT, N_LANE), jnp.float32),
        "b3": 0.01 * jax.random.normal(keys[8], (1, N_LANE), jnp.float32),
    }

    # inputs: (batch_size * num_lane, tde_merger_dim)
    x = jax.random.normal(keys[9], (BATCH * N_LANE, N_IN), jnp.float32)

    att_w, att_f = lane_attention(x, params)
    jax.block_until_ready((att_w, att_f))

    ref_w, ref_f = lane_attention_ref(x, params)
    assert att_w.shape == (BATCH, N_LANE) and att_f.shape == (BATCH, N_IN)
    assert jnp.allclose(att_w, ref_w, atol=1e-5, rtol=1e-5)
    assert jnp.allclose(att_f, ref_f, atol=1e-5, rtol=1e-5)

    # Also exercise a multi-block, padded-batch path (grid > 1).
    x_big = jax.random.normal(keys[9], (300 * N_LANE, N_IN), jnp.float32)
    bw, bf = lane_attention(x_big, params, block_b=64)
    jax.block_until_ready((bw, bf))
    rw, rf = lane_attention_ref(x_big, params)
    assert jnp.allclose(bw, rw, atol=1e-5, rtol=1e-5)
    assert jnp.allclose(bf, rf, atol=1e-5, rtol=1e-5)

    print("KERNEL_OK")
</pallas_src>

<mosaic_0001>
module attributes {stable_mosaic.version = 11 : i64} {
  func.func @lane_attention_kernel(%arg0: i32, %arg1: memref<8x128xf32, #tpu.memory_space<vmem>>, %arg2: memref<128x32xf32, #tpu.memory_space<vmem>>, %arg3: memref<1x32xf32, #tpu.memory_space<vmem>>, %arg4: memref<32x32xf32, #tpu.memory_space<vmem>>, %arg5: memref<1x32xf32, #tpu.memory_space<vmem>>, %arg6: memref<32x4xf32, #tpu.memory_space<vmem>>, %arg7: memref<1x4xf32, #tpu.memory_space<vmem>>, %arg8: memref<8x128xf32, #tpu.memory_space<vmem>>) attributes {dimension_semantics = [#tpu.dimension_semantics<parallel>], iteration_bounds = array<i64: 1>, scalar_prefetch = 0 : i64, scratch_operands = 0 : i64, tpu.core_type = #tpu.core_type<tc>, window_params = [{transform_indices = @transform_0, window_bounds = array<i64: 8, 128>}, {pipeline_mode = #tpu.pipeline_mode<synchronous>, transform_indices = @transform_1, window_bounds = array<i64: 128, 32>}, {pipeline_mode = #tpu.pipeline_mode<synchronous>, transform_indices = @transform_2, window_bounds = array<i64: 1, 32>}, {pipeline_mode = #tpu.pipeline_mode<synchronous>, transform_indices = @transform_3, window_bounds = array<i64: 32, 32>}, {pipeline_mode = #tpu.pipeline_mode<synchronous>, transform_indices = @transform_4, window_bounds = array<i64: 1, 32>}, {pipeline_mode = #tpu.pipeline_mode<synchronous>, transform_indices = @transform_5, window_bounds = array<i64: 32, 4>}, {pipeline_mode = #tpu.pipeline_mode<synchronous>, transform_indices = @transform_6, window_bounds = array<i64: 1, 4>}, {transform_indices = @transform_7, window_bounds = array<i64: 8, 128>}]} {
    %c0 = arith.constant 0 : index
    %c0_0 = arith.constant 0 : index
    %0 = vector.load %arg1[%c0, %c0_0] : memref<8x128xf32, #tpu.memory_space<vmem>>, vector<8x128xf32>
    %c0_1 = arith.constant 0 : index
    %c0_2 = arith.constant 0 : index
    %1 = vector.load %arg2[%c0_1, %c0_2] : memref<128x32xf32, #tpu.memory_space<vmem>>, vector<128x32xf32>
    %cst = arith.constant dense<0.000000e+00> : vector<8x32xf32>
    %2 = tpu.matmul %0, %1, %cst {dimension_numbers = #tpu.dot_dimension_numbers<[1], [0], [0], [1], [0, 0, 1, 1], [], []>} : vector<8x128xf32>, vector<128x32xf32>, vector<8x32xf32> -> vector<8x32xf32>
    %c0_3 = arith.constant 0 : index
    %c0_4 = arith.constant 0 : index
    %3 = vector.load %arg3[%c0_3, %c0_4] : memref<1x32xf32, #tpu.memory_space<vmem>>, vector<1x32xf32>
    %4 = vector.broadcast %3 : vector<1x32xf32> to vector<8x32xf32>
    %5 = arith.addf %2, %4 : vector<8x32xf32>
    %cst_5 = arith.constant 0.000000e+00 : f32
    %6 = vector.broadcast %cst_5 : f32 to vector<8x32xf32>
    %7 = arith.maximumf %5, %6 : vector<8x32xf32>
    %c0_6 = arith.constant 0 : index
    %c0_7 = arith.constant 0 : index
    %8 = vector.load %arg4[%c0_6, %c0_7] : memref<32x32xf32, #tpu.memory_space<vmem>>, vector<32x32xf32>
    %cst_8 = arith.constant dense<0.000000e+00> : vector<8x32xf32>
    %9 = tpu.matmul %7, %8, %cst_8 {dimension_numbers = #tpu.dot_dimension_numbers<[1], [0], [0], [1], [0, 0, 1, 1], [], []>} : vector<8x32xf32>, vector<32x32xf32>, vector<8x32xf32> -> vector<8x32xf32>
    %c0_9 = arith.constant 0 : index
    %c0_10 = arith.constant 0 : index
    %10 = vector.load %arg5[%c0_9, %c0_10] : memref<1x32xf32, #tpu.memory_space<vmem>>, vector<1x32xf32>
    %11 = vector.broadcast %10 : vector<1x32xf32> to vector<8x32xf32>
    %12 = arith.addf %9, %11 : vector<8x32xf32>
    %c0_11 = arith.constant 0 : index
    %c0_12 = arith.constant 0 : index
    %13 = vector.load %arg6[%c0_11, %c0_12] : memref<32x4xf32, #tpu.memory_space<vmem>>, vector<32x4xf32>
    %cst_13 = arith.constant dense<0.000000e+00> : vector<8x4xf32>
    %14 = tpu.matmul %12, %13, %cst_13 {dimension_numbers = #tpu.dot_dimension_numbers<[1], [0], [0], [1], [0, 0, 1, 1], [], []>} : vector<8x32xf32>, vector<32x4xf32>, vector<8x4xf32> -> vector<8x4xf32>
    %c0_14 = arith.constant 0 : index
    %c0_15 = arith.constant 0 : index
    %15 = vector.load %arg7[%c0_14, %c0_15] : memref<1x4xf32, #tpu.memory_space<vmem>>, vector<1x4xf32>
    %16 = vector.broadcast %15 : vector<1x4xf32> to vector<8x4xf32>
    %17 = arith.addf %14, %16 : vector<8x4xf32>
    %cst_16 = arith.constant dense<0xFF800000> : vector<8xf32>
    %18 = vector.multi_reduction <maximumf>, %17, %cst_16 [1] : vector<8x4xf32> to vector<8xf32>
    %19 = vector.shape_cast %18 : vector<8xf32> to vector<8x1xf32>
    %20 = vector.broadcast %19 : vector<8x1xf32> to vector<8x4xf32>
    %21 = arith.subf %17, %20 : vector<8x4xf32>
    %22 = math.exp %21 : vector<8x4xf32>
    %cst_17 = arith.constant dense<0.000000e+00> : vector<8xf32>
    %23 = vector.multi_reduction <add>, %22, %cst_17 [1] : vector<8x4xf32> to vector<8xf32>
    %24 = vector.shape_cast %23 : vector<8xf32> to vector<8x1xf32>
    %25 = vector.broadcast %24 : vector<8x1xf32> to vector<8x4xf32>
    %26 = arith.divf %22, %25 : vector<8x4xf32>
    %27 = vector.extract_strided_slice %26 {offsets = [0, 0], sizes = [8, 1], strides = [1, 1]} : vector<8x4xf32> to vector<8x1xf32>
    %28 = vector.extract_strided_slice %0 {offsets = [0, 0], sizes = [8, 32], strides = [1, 1]} : vector<8x128xf32> to vector<8x32xf32>
    %29 = vector.broadcast %27 : vector<8x1xf32> to vector<8x32xf32>
    %30 = arith.mulf %29, %28 : vector<8x32xf32>
    %31 = vector.extract_strided_slice %26 {offsets = [0, 1], sizes = [8, 1], strides = [1, 1]} : vector<8x4xf32> to vector<8x1xf32>
    %32 = vector.extract_strided_slice %0 {offsets = [0, 32], sizes = [8, 32], strides = [1, 1]} : vector<8x128xf32> to vector<8x32xf32>
    %33 = vector.broadcast %31 : vector<8x1xf32> to vector<8x32xf32>
    %34 = arith.mulf %33, %32 : vector<8x32xf32>
    %35 = arith.addf %30, %34 : vector<8x32xf32>
    %36 = vector.extract_strided_slice %26 {offsets = [0, 2], sizes = [8, 1], strides = [1, 1]} : vector<8x4xf32> to vector<8x1xf32>
    %37 = vector.extract_strided_slice %0 {offsets = [0, 64], sizes = [8, 32], strides = [1, 1]} : vector<8x128xf32> to vector<8x32xf32>
    %38 = vector.broadcast %36 : vector<8x1xf32> to vector<8x32xf32>
    %39 = arith.mulf %38, %37 : vector<8x32xf32>
    %40 = arith.addf %35, %39 : vector<8x32xf32>
    %41 = vector.extract_strided_slice %26 {offsets = [0, 3], sizes = [8, 1], strides = [1, 1]} : vector<8x4xf32> to vector<8x1xf32>
    %42 = vector.extract_strided_slice %0 {offsets = [0, 96], sizes = [8, 32], strides = [1, 1]} : vector<8x128xf32> to vector<8x32xf32>
    %43 = vector.broadcast %41 : vector<8x1xf32> to vector<8x32xf32>
    %44 = arith.mulf %43, %42 : vector<8x32xf32>
    %45 = arith.addf %40, %44 : vector<8x32xf32>
    %cst_18 = arith.constant 0.000000e+00 : f32
    %46 = vector.broadcast %cst_18 : f32 to vector<8x92xf32>
    %47 = tpu.concatenate %45, %26, %46 in 1 : vector<8x32xf32>, vector<8x4xf32>, vector<8x92xf32> -> vector<8x128xf32>
    %c0_19 = arith.constant 0 : index
    %c0_20 = arith.constant 0 : index
    %48 = vector.load %arg8[%c0_19, %c0_20] : memref<8x128xf32, #tpu.memory_space<vmem>>, vector<8x128xf32>
    tpu.vector_store %arg8[%c0_19, %c0_20], %47 {strides = array<i32>} : memref<8x128xf32, #tpu.memory_space<vmem>>, vector<8x128xf32>,
    return
  }
  func.func @transform_0(%arg0: i32) -> (i32, i32) {
    %c0_i32 = arith.constant 0 : i32
    %c0_i32_0 = arith.constant 0 : i32
    return %arg0, %c0_i32 : i32, i32
  }
  func.func @transform_1(%arg0: i32) -> (i32, i32) {
    %c0_i32 = arith.constant 0 : i32
    %c0_i32_0 = arith.constant 0 : i32
    %c0_i32_1 = arith.constant 0 : i32
    return %c0_i32, %c0_i32_0 : i32, i32
  }
  func.func @transform_2(%arg0: i32) -> (i32, i32) {
    %c0_i32 = arith.constant 0 : i32
    %c0_i32_0 = arith.constant 0 : i32
    %c0_i32_1 = arith.constant 0 : i32
    return %c0_i32, %c0_i32_0 : i32, i32
  }
  func.func @transform_3(%arg0: i32) -> (i32, i32) {
    %c0_i32 = arith.constant 0 : i32
    %c0_i32_0 = arith.constant 0 : i32
    %c0_i32_1 = arith.constant 0 : i32
    return %c0_i32, %c0_i32_0 : i32, i32
  }
  func.func @transform_4(%arg0: i32) -> (i32, i32) {
    %c0_i32 = arith.constant 0 : i32
    %c0_i32_0 = arith.constant 0 : i32
    %c0_i32_1 = arith.constant 0 : i32
    return %c0_i32, %c0_i32_0 : i32, i32
  }
  func.func @transform_5(%arg0: i32) -> (i32, i32) {
    %c0_i32 = arith.constant 0 : i32
    %c0_i32_0 = arith.constant 0 : i32
    %c0_i32_1 = arith.constant 0 : i32
    return %c0_i32, %c0_i32_0 : i32, i32
  }
  func.func @transform_6(%arg0: i32) -> (i32, i32) {
    %c0_i32 = arith.constant 0 : i32
    %c0_i32_0 = arith.constant 0 : i32
    %c0_i32_1 = arith.constant 0 : i32
    return %c0_i32, %c0_i32_0 : i32, i32
  }
  func.func @transform_7(%arg0: i32) -> (i32, i32) {
    %c0_i32 = arith.constant 0 : i32
    %c0_i32_0 = arith.constant 0 : i32
    return %arg0, %c0_i32 : i32, i32
  }
}

</mosaic_0001>

<llo_original>
// kernel: tpu_custom_call.1
$region0: #{tpu_custom_call.1}
  #allocation0 [shape = 'u32[]', space=smem, size = 0x4, offset = 0x4, fixed_abs, tag = 'smem constant byte address 0x4 - core index']
  #allocation1 [shape = 'u32[72,128]{1,0:T(1,128)}', space=vmem, size = 0x9000, scoped, tag = 'internal scratch']
  %s0 = inlined_call_operand.vmem [shape: f32[8,128], index: 0, kind: input, shape index: {}]
  %s1 = inlined_call_operand.vmem [shape: f32[128,32], index: 1, kind: input, shape index: {}]
  %s2 = inlined_call_operand.vmem [shape: f32[1,32], index: 2, kind: input, shape index: {}]
  %s3 = inlined_call_operand.vmem [shape: f32[32,32], index: 3, kind: input, shape index: {}]
  %s4 = inlined_call_operand.vmem [shape: f32[1,32], index: 4, kind: input, shape index: {}]
  %s5 = inlined_call_operand.vmem [shape: f32[32,4], index: 5, kind: input, shape index: {}]
  %s6 = inlined_call_operand.vmem [shape: f32[1,4], index: 6, kind: input, shape index: {}]
  %s7 = inlined_call_operand.hbm [shape: f32[8,128], index: 7, kind: output, shape index: {}]
  %s8 = sld [smem:[#allocation0]]
  $region38: #{tpu_custom_call.1} parent=0
    _
  %s10 = ssub.s32 1, %s8
  %s11 = scalar_select 0, %s10, %s8
  $region1: #{tpu_custom_call.1} parent=0
    #allocation2 [shape = 'u8[4096]{0}', space=vmem, size = 0x1000, scoped, tag = 'output window, operand 0, single buffered']
    #allocation3 [shape = 's32[1]{0}', space=sflag, size = 0x4, scoped, tag = 'scoped memory for tpu_custom_call.1']
    %12 = vsyncpa [#allocation3], 0
    // Predicated region
    $region2: #{tpu_custom_call.1} parent=1 // pred_check
      _
    $region3: #{tpu_custom_call.1} parent=1 // pred_check_branch
      %14 = sbr.rel (0) target = $region5
    $region4: #{tpu_custom_call.1} parent=1 // pred_region
      _
    $region5: #{tpu_custom_call.1} parent=1 // pred_fallthru
      _
    // Predicated region
    $region6: #{tpu_custom_call.1} parent=1 // pred_check
      _
    $region7: #{tpu_custom_call.1} parent=1 // pred_check_branch
      %16 = sbr.rel (0) target = $region9
    $region8: #{tpu_custom_call.1} parent=1 // pred_region
      _
    $region9: #{tpu_custom_call.1} parent=1 // pred_fallthru
      _
    // Predicated region
    $region10: #{tpu_custom_call.1} parent=1 // pred_check
      _
    $region11: #{tpu_custom_call.1} parent=1 // pred_check_branch
      %18 = sbr.rel (0) target = $region13
    $region12: #{tpu_custom_call.1} parent=1 // pred_region
      _
    $region13: #{tpu_custom_call.1} parent=1 // pred_fallthru
      _
    // Predicated region
    $region14: #{tpu_custom_call.1} parent=1 // pred_check
      _
    $region15: #{tpu_custom_call.1} parent=1 // pred_check_branch
      %20 = sbr.rel (0) target = $region17
    $region16: #{tpu_custom_call.1} parent=1 // pred_region
      _
    $region17: #{tpu_custom_call.1} parent=1 // pred_fallthru
      _
    // Predicated region
    $region18: #{tpu_custom_call.1} parent=1 // pred_check
      _
    $region19: #{tpu_custom_call.1} parent=1 // pred_check_branch
      %22 = sbr.rel (0) target = $region21
    $region20: #{tpu_custom_call.1} parent=1 // pred_region
      _
    $region21: #{tpu_custom_call.1} parent=1 // pred_fallthru
      _
    // Predicated region
    $region22: #{tpu_custom_call.1} parent=1 // pred_check
      _
    $region23: #{tpu_custom_call.1} parent=1 // pred_check_branch
      %24 = sbr.rel (0) target = $region25
    $region24: #{tpu_custom_call.1} parent=1 // pred_region
      _
    $region25: #{tpu_custom_call.1} parent=1 // pred_fallthru
      _
    // Predicated region
    $region26: #{tpu_custom_call.1} parent=1 // pred_check
      _
    $region27: #{tpu_custom_call.1} parent=1 // pred_check_branch
      %26 = sbr.rel (0) target = $region29
    $region28: #{tpu_custom_call.1} parent=1 // pred_region
      _
    $region29: #{tpu_custom_call.1} parent=1 // pred_fallthru
      _
    %v27 = vld [vmem:[%s0] sm:$0xff]
    %v28 = vld [vmem:[%s1] sm:$0xff]
    %v29 = vld [vmem:[%s1 + $0x8] sm:$0xff]
    %v30 = vld [vmem:[%s1 + $0x10] sm:$0xff]
    %v31 = vld [vmem:[%s1 + $0x18] sm:$0xff]
    %v32 = vld [vmem:[%s1 + $0x20] sm:$0xff]
    %v33 = vld [vmem:[%s1 + $0x28] sm:$0xff]
    %v34 = vld [vmem:[%s1 + $0x30] sm:$0xff]
    %v35 = vld [vmem:[%s1 + $0x38] sm:$0xff]
    %v36 = vld [vmem:[%s1 + $0x40] sm:$0xff]
    %v37 = vld [vmem:[%s1 + $0x48] sm:$0xff]
    %v38 = vld [vmem:[%s1 + $0x50] sm:$0xff]
    %v39 = vld [vmem:[%s1 + $0x58] sm:$0xff]
    %v40 = vld [vmem:[%s1 + $0x60] sm:$0xff]
    %v41 = vld [vmem:[%s1 + $0x68] sm:$0xff]
    %v42 = vld [vmem:[%s1 + $0x70] sm:$0xff]
    %v43 = vld [vmem:[%s1 + $0x78] sm:$0xff]
    %v44 = vld [vmem:[%s2] sm:$0x1]
    %v46 = vperm.slane %v44, 0
    %48 = vmatpush.msra.mxu0 %v43
    %49 = vmatpush.msra.mxu0 %v42
    %50 = vmatpush.msra.mxu0 %v41
    %51 = vmatpush.msra.mxu0 %v40
    %52 = vmatpush.msra.mxu0 %v39
    %53 = vmatpush.msra.mxu0 %v38
    %54 = vmatpush.msra.mxu0 %v37
    %55 = vmatpush.msra.mxu0 %v36
    %56 = vmatpush.msra.mxu0 %v35
    %57 = vmatpush.msra.mxu0 %v34
    %58 = vmatpush.msra.mxu0 %v33
    %59 = vmatpush.msra.mxu0 %v32
    %60 = vmatpush.msra.mxu0 %v31
    %61 = vmatpush.msra.mxu0 %v30
    %62 = vmatpush.msra.mxu0 %v29
    %63 = vmatpush.msra.mxu0 %v28
    %64 = vmatmul.f32.gmra.mxu0 %v27
    %v65 = vpop.f32.mrf.mxu0
    %v66 = vadd.f32 %v46, %v65
    %67 = vdwg.mxu0
    %v68 = vmax.f32 %v66, 0.0
    %v69 = vld [vmem:[%s3] sm:$0xff]
    %v70 = vld [vmem:[%s3 + $0x8] sm:$0xff]
    %v71 = vld [vmem:[%s3 + $0x10] sm:$0xff]
    %v72 = vld [vmem:[%s3 + $0x18] sm:$0xff]
    %v73 = vld [vmem:[%s4] sm:$0x1]
    %v75 = vperm.slane %v73, 0
    %vm77 = vcmask 261120
    %v79 = vsel %vm77, %v68, 0
    %81 = vmatpush.msra.mxu0 0.0
    %82 = vmatpush.msra.mxu0 0.0
    %83 = vmatpush.msra.mxu0 0.0
    %84 = vmatpush.msra.mxu0 0.0
    %85 = vmatpush.msra.mxu0 0.0
    %86 = vmatpush.msra.mxu0 0.0
    %87 = vmatpush.msra.mxu0 0.0
    %88 = vmatpush.msra.mxu0 0.0
    %89 = vmatpush.msra.mxu0 0.0
    %90 = vmatpush.msra.mxu0 0.0
    %91 = vmatpush.msra.mxu0 0.0
    %92 = vmatpush.msra.mxu0 0.0
    %93 = vmatpush.msra.mxu0 %v72
    %94 = vmatpush.msra.mxu0 %v71
    %95 = vmatpush.msra.mxu0 %v70
    %96 = vmatpush.msra.mxu0 %v69
    %97 = vmatmul.f32.gmra.mxu0 %v79
    %v98 = vpop.f32.mrf.mxu0
    %v99 = vadd.f32 %v75, %v98
    %100 = vdwg.mxu0
    %v101 = vld [vmem:[%s5] sm:$0xff]
    %v102 = vld [vmem:[%s5 + $0x8] sm:$0xff]
    %v103 = vld [vmem:[%s5 + $0x10] sm:$0xff]
    %v104 = vld [vmem:[%s5 + $0x18] sm:$0xff]
    %v105 = vld [vmem:[%s6] sm:$0x1]
    %v107 = vperm.slane %v105, 0
    %v110 = vsel %vm77, %v99, 0
    %112 = vmatpush.msra.mxu0 0.0
    %113 = vmatpush.msra.mxu0 0.0
    %114 = vmatpush.msra.mxu0 0.0
    %115 = vmatpush.msra.mxu0 0.0
    %116 = vmatpush.msra.mxu0 0.0
    %117 = vmatpush.msra.mxu0 0.0
    %118 = vmatpush.msra.mxu0 0.0
    %119 = vmatpush.msra.mxu0 0.0
    %120 = vmatpush.msra.mxu0 0.0
    %121 = vmatpush.msra.mxu0 0.0
    %122 = vmatpush.msra.mxu0 0.0
    %123 = vmatpush.msra.mxu0 0.0
    %124 = vmatpush.msra.mxu0 %v104
    %125 = vmatpush.msra.mxu0 %v103
    %126 = vmatpush.msra.mxu0 %v102
    %127 = vmatpush.msra.mxu0 %v101
    %128 = vmatmul.f32.gmra.mxu0 %v110
    %v129 = vpop.f32.mrf.mxu0
    %v130 = vadd.f32 %v107, %v129
    %131 = vdwg.mxu0
    %vm132 = vcmask 31744
    %v133 = vsel %vm132, %v130, -inf
    %134 = vmax.xlane.f32.xlu0 %v133
    %v135 = vpop.xlane.xlu0 %134
    %v136 = vsub.f32 %v130, %v135
    %v137 = vmul.f32 %v136, 1.442695
    %v138 = vpow.pop %v137
    %v139 = vsel %vm132, %v138, 0.0
    %140 = vadd.xlane.f32.xlu0 %v139
    %v141 = vpop.xlane.xlu0 %140
    %v142 = vrcp.pop %v141
    %v143 = vmul.f32 %v141, %v142
    %v144 = vsub.f32 1.0, %v143
    %v145 = vmul.f32 %v142, %v144
    %v146 = vadd.f32 %v142, %v145
    %vm147 = vweird.f32 %v141
    %vm148 = vweird.f32 %v142
    %vm149 = vmor %vm147, %vm148
    %v150 = vsel %vm149, %v142, %v146
    %v151 = vand.u32 2147483647, %v141
    %vm152 = vcmp.eq.f32.partialorder %v151, 8.507059e+37
    %v153 = vand.u32 %v141, 2147483648
    %v154 = vor.u32 1.1754944e-38, %v153
    %v155 = vsel %vm152, %v154, %v150
    %v156 = vmul.f32 %v138, %v155
    %158 = vset.pattern.permute.xlu0 0
    %159 = vperm.xlu0 %158, %v156
    %v160 = vpop.permute.xlu0 %159
    %v162 = vmul.f32 %v160, %v27
    %163 = vset.pattern.permute.xlu0 1
    %164 = vperm.xlu0 %163, %v156
    %v165 = vpop.permute.xlu0 %164
    %v167 = vmul.f32 %v165, %v27
    %169 = vrot.lane.b32.xlu0 %v167, 96
    %v170 = vpop.permute.xlu0 %169
    %v172 = vadd.f32 %v162, %v170
    %173 = vset.pattern.permute.xlu0 2
    %174 = vperm.xlu0 %173, %v156
    %v175 = vpop.permute.xlu0 %174
    %v177 = vmul.f32 %v175, %v27
    %179 = vrot.lane.b32.xlu0 %v177, 64
    %v180 = vpop.permute.xlu0 %179
    %v182 = vadd.f32 %v172, %v180
    %183 = vset.pattern.permute.xlu0 3
    %184 = vperm.xlu0 %183, %v156
    %v185 = vpop.permute.xlu0 %184
    %v187 = vmul.f32 %v185, %v27
    %189 = vrot.lane.b32.xlu0 %v187, 32
    %v190 = vpop.permute.xlu0 %189
    %v192 = vadd.f32 %v182, %v190
    %193 = vrot.lane.b32.xlu0 %v156, 32
    %v194 = vpop.permute.xlu0 %193
    %v196 = vsel %vm77, %v192, %v194
    %vm197 = vcmask 293888
    %v198 = vsel %vm197, %v196, 0.0
    %199 = vst [vmem:[#allocation2] sm:$0xff] %v198
    // Predicated region
    $region30: #{tpu_custom_call.1} parent=1 // pred_check
      _
    $region31: #{tpu_custom_call.1} parent=1 // pred_check_branch
      %201 = sbr.rel (0) target = $region33
    $region32: #{tpu_custom_call.1} parent=1 // pred_region
      %203 = vsyncadd [#allocation3], 0
      %s205 = sshll.u32 [#allocation2], 4
      %s206 = int_to_ptr.vmem [resolvable:$true] %s205
      %s207 = sshll.u32 %s7, 4
      %s208 = int_to_ptr.hbm [resolvable:$true] %s207
      %210 = dma.vmem_to_hbm [thread:$0]  %s206, 128, %s208, [#allocation3]
    $region33: #{tpu_custom_call.1} parent=1 // pred_fallthru
      _
    // Predicated region
    $region34: #{tpu_custom_call.1} parent=1 // pred_check
      _
    $region35: #{tpu_custom_call.1} parent=1 // pred_check_branch
      %212 = sbr.rel (0) target = $region37
    $region36: #{tpu_custom_call.1} parent=1 // pred_region
      %214 = dma.done [#allocation3], 128
    $region37: #{tpu_custom_call.1} parent=1 // pred_fallthru
      _
    %215 = vsyncpa [#allocation3], 1

</llo_original>
